<compile_context>
chip_gen: v6e
topology: v6e:2x2x1
jax: 0.10.0
libtpu: 0.0.40
codegen_flags: <defaults>
</compile_context>

<pallas_src>
import jax
import jax.numpy as jnp
from jax.experimental import pallas as pl
from jax.experimental.pallas import tpu as pltpu


def _round_up(x, m):
    return ((x + m - 1) // m) * m


def _make_kernel(*, c, tile_r, united):
    """Per-tile kernel: pure VPU/EUP elementwise work; writes one [8,128]
    partial-sum slab per quantity.  No cross-step scratch, no XLU."""

    def tile_reduce(q):                     # [tile_r,128] -> [8,128], VPU adds
        return q.reshape(tile_r // 8, 8, 128).sum(axis=0)

    def kernel(*refs):
        if united:
            tgt_ref, inf_ref, out_ref = refs
            p_ref = in1_ref = None
        else:
            p_ref, tgt_ref, in1_ref, inf_ref, out_ref = refs

        t0 = tgt_ref[0].astype(jnp.float32)          # [tile_r, 128]
        t1 = tgt_ref[1].astype(jnp.float32)
        mask = (t0 > 0.0).astype(jnp.float32)

        def masked_ce(lg_ref):
            # Two-pass unrolled VPU reduction over the (small, static) class
            # planes; the ref is indexed per plane -> no full [C, tile_r, 128]
            # materialization, short live ranges.
            m = lg_ref[0].astype(jnp.float32)
            for cc in range(1, c):
                m = jnp.maximum(m, lg_ref[cc].astype(jnp.float32))
            s = jnp.zeros_like(m)
            tgt_logit = jnp.zeros_like(m)
            for cc in range(c):
                x = lg_ref[cc].astype(jnp.float32)
                s = s + jnp.exp(x - m)
                tgt_logit = tgt_logit + jnp.where(t1 == float(cc), x, 0.0)
            lse = m + jnp.log(s)
            return (lse - tgt_logit) * mask          # [tile_r, 128]

        if united:
            out_ref[0, 0] = tile_reduce(mask)
            out_ref[0, 1] = tile_reduce(masked_ce(inf_ref))
        else:
            p = p_ref[...]
            # BCELoss with PyTorch's log clamp at -100 (padded rows -> 0).
            logp = jnp.maximum(jnp.log(p), -100.0)
            log1mp = jnp.maximum(jnp.log(1.0 - p), -100.0)
            bce = -(t0 * logp + (1.0 - t0) * log1mp)
            out_ref[0, 0] = tile_reduce(bce)
            out_ref[0, 1] = tile_reduce(mask)
            out_ref[0, 2] = tile_reduce(masked_ce(in1_ref))
            out_ref[0, 3] = tile_reduce(masked_ce(inf_ref))

    return kernel


def united_loss(inputs, target, *, alpha, beta=1.0, mode='normal',
                logits_dtype=jnp.float32):
    """inputs = (input0[N], input1[N,C], input_final[N,C]); target = [N,2]."""
    input0, input1, input_final = inputs[0], inputs[1], inputs[-1]
    n = int(input0.shape[0])
    c = int(input1.shape[1])
    united = (mode == 'united')
    num_acc = 2 if united else 4
    n_logit = 1 if united else 2

    # Class ids are exact in bf16 up to 256; fall back to f32 beyond that.
    tgt_dtype = jnp.bfloat16 if c <= 256 else jnp.float32
    logit_bytes = jnp.dtype(logits_dtype).itemsize
    tgt_bytes = jnp.dtype(tgt_dtype).itemsize

    r = -(-n // 128)                                  # rows of 128 samples

    # Double-buffered input bytes per row-of-128 samples.
    per_row = 2 * (n_logit * c * 128 * logit_bytes
                   + 2 * 128 * tgt_bytes
                   + (0 if united else 128 * 4))

    budget = 10 << 20                                 # input working-set target
    tile_r = max(16, min(512, ((budget // max(per_row, 1)) // 16) * 16))
    tile_r = min(tile_r, _round_up(r, 16))            # don't over-pad small N
    n_tiles = -(-r // tile_r)
    r_pad = n_tiles * tile_r
    n_pad = r_pad * 128

    footprint = per_row * tile_r + 2 * num_acc * 8 * 128 * 4
    vmem_limit = int(min(max(16 << 20, footprint + (4 << 20)), 48 << 20))

    def to_rows(x, dtype):                            # [n] -> [r_pad, 128]
        x = jnp.pad(x.astype(dtype), (0, n_pad - n))
        return x.reshape(r_pad, 128)

    def to_planes(x, dtype):                          # [n, c] -> [c, r_pad, 128]
        x = jnp.pad(x.astype(dtype), ((0, n_pad - n), (0, 0)))
        return x.T.reshape(c, r_pad, 128)

    operands = []
    in_specs = []
    if not united:
        operands.append(to_rows(input0.reshape(n), jnp.float32))
        in_specs.append(pl.BlockSpec((tile_r, 128), lambda i: (i, 0)))
    tgts = jnp.stack([to_rows(target[:, 0], tgt_dtype),
                      to_rows(target[:, 1], tgt_dtype)], axis=0)
    operands.append(tgts)
    in_specs.append(pl.BlockSpec((2, tile_r, 128), lambda i: (0, i, 0)))
    if not united:
        operands.append(to_planes(input1, logits_dtype))
        in_specs.append(pl.BlockSpec((c, tile_r, 128), lambda i: (0, i, 0)))
    operands.append(to_planes(input_final, logits_dtype))
    in_specs.append(pl.BlockSpec((c, tile_r, 128), lambda i: (0, i, 0)))

    n_ce = 1 if united else 2
    bytes_accessed = int(sum(int(op.size) * op.dtype.itemsize for op in operands)
                         + n_tiles * num_acc * 8 * 128 * 4)
    cost = pl.CostEstimate(
        flops=int(n_pad * ((0 if united else 8) + 7 * c * n_ce)),
        transcendentals=int(n_pad * ((0 if united else 2) + (c + 1) * n_ce)),
        bytes_accessed=bytes_accessed,
    )

    partials = pl.pallas_call(
        _make_kernel(c=c, tile_r=tile_r, united=united),
        out_shape=jax.ShapeDtypeStruct((n_tiles, num_acc, 8, 128), jnp.float32),
        grid_spec=pltpu.PrefetchScalarGridSpec(
            num_scalar_prefetch=0,
            grid=(n_tiles,),
            in_specs=in_specs,
            out_specs=pl.BlockSpec((1, num_acc, 8, 128),
                                   lambda i: (i, 0, 0, 0)),
        ),
        compiler_params=pltpu.CompilerParams(
            dimension_semantics=("parallel",),   # megacore-shardable on v7x
            vmem_limit_bytes=vmem_limit),
        cost_estimate=cost,
    )(*operands)

    # Tiny JAX epilogue: cross-tile/lane reduction + the final divides.
    sums = jnp.sum(partials, axis=(0, 2, 3))          # [num_acc]
    if united:
        cnt, ce3 = sums[0], sums[1]
        return beta * (ce3 / cnt)
    bce_sum, cnt, ce2, ce3 = sums[0], sums[1], sums[2], sums[3]
    return bce_sum / float(n) + alpha * (ce2 / cnt) + beta * (ce3 / cnt)


def united_loss_ref(inputs, target, *, alpha, beta=1.0, mode='normal'):
    """Pure-JAX reference mirroring the PyTorch module (for verification)."""
    input0, input1, input_final = (x.astype(jnp.float32) for x in
                                   (inputs[0], inputs[1], inputs[-1]))
    t0 = target[:, 0].astype(jnp.float32)
    t1 = target[:, 1].astype(jnp.int32)

    logp = jnp.maximum(jnp.log(input0), -100.0)
    log1mp = jnp.maximum(jnp.log(1.0 - input0), -100.0)
    loss1 = jnp.mean(-(t0 * logp + (1.0 - t0) * log1mp))

    mask = t0 > 0.0
    cnt = jnp.sum(mask.astype(jnp.float32))

    def masked_ce(logits):
        lse = jax.scipy.special.logsumexp(logits, axis=-1)
        tgt_logit = jnp.take_along_axis(logits, t1[:, None], axis=-1)[:, 0]
        per = lse - tgt_logit
        return jnp.sum(jnp.where(mask, per, 0.0)) / cnt

    loss2 = masked_ce(input1)
    loss3 = masked_ce(input_final)
    if mode != 'united':
        return loss1 + alpha * loss2 + beta * loss3
    return beta * loss3


def _make_inputs(key, n, c):
    k0, k1, k2, k3, k4 = jax.random.split(key, 5)
    input0 = jax.nn.sigmoid(jax.random.normal(k0, (n,), jnp.float32))   # probs
    input1 = jax.random.normal(k1, (n, c), jnp.float32)                 # logits
    input_final = jax.random.normal(k2, (n, c), jnp.float32)            # logits
    target0 = jax.random.bernoulli(k3, 0.6, (n,)).astype(jnp.int32)
    target0 = target0.at[0].set(1)      # ensure the masked subset is non-empty
    target1 = jax.random.randint(k4, (n,), 0, c, jnp.int32)
    target = jnp.stack([target0, target1], axis=1)                      # [N, 2]
    return (input0, input1, input_final), target


if __name__ == "__main__":
    # Module "parameters": loss list + scalar hyperparameters (no weights).
    # UnitedLoss(['BCELoss', 'CELoss', 'CELoss'], alpha=0.5, beta=1.0)
    alpha, beta = 0.5, 1.0
    key = jax.random.PRNGKey(0)
    k_small, k_big = jax.random.split(key)

    # --- small shape matching the module's forward (N=8, C=4) ---------------
    inputs, target = _make_inputs(k_small, 8, 4)

    out = jax.block_until_ready(
        united_loss(inputs, target, alpha=alpha, beta=beta, mode='normal'))
    ref = united_loss_ref(inputs, target, alpha=alpha, beta=beta, mode='normal')
    assert jnp.allclose(out, ref, rtol=1e-5, atol=1e-5), (out, ref)

    out_u = jax.block_until_ready(
        united_loss(inputs, target, alpha=alpha, beta=beta, mode='united'))
    ref_u = united_loss_ref(inputs, target, alpha=alpha, beta=beta, mode='united')
    assert jnp.allclose(out_u, ref_u, rtol=1e-5, atol=1e-5), (out_u, ref_u)

    # --- larger N to exercise padding of a partial 128-lane row --------------
    inputs_b, target_b = _make_inputs(k_big, 300, 4)
    out_b = jax.block_until_ready(
        united_loss(inputs_b, target_b, alpha=alpha, beta=beta, mode='normal'))
    ref_b = united_loss_ref(inputs_b, target_b, alpha=alpha, beta=beta,
                            mode='normal')
    assert jnp.allclose(out_b, ref_b, rtol=1e-5, atol=1e-5), (out_b, ref_b)

    # --- optional HBM-byte-saving path: bf16 logit transfer ------------------
    out_bf = jax.block_until_ready(
        united_loss(inputs_b, target_b, alpha=alpha, beta=beta, mode='normal',
                    logits_dtype=jnp.bfloat16))
    assert jnp.allclose(out_bf, ref_b, rtol=3e-2, atol=3e-2), (out_bf, ref_b)

    print("KERNEL_OK")
</pallas_src>

<mosaic_0001>
module attributes {stable_mosaic.version = 11 : i64} {
  func.func @kernel(%arg0: i32, %arg1: memref<16x128xf32, #tpu.memory_space<vmem>>, %arg2: memref<2x16x128xbf16, #tpu.memory_space<vmem>>, %arg3: memref<4x16x128xf32, #tpu.memory_space<vmem>>, %arg4: memref<4x16x128xf32, #tpu.memory_space<vmem>>, %arg5: memref<1x4x8x128xf32, #tpu.memory_space<vmem>>) attributes {dimension_semantics = [#tpu.dimension_semantics<parallel>], iteration_bounds = array<i64: 1>, scalar_prefetch = 0 : i64, scratch_operands = 0 : i64, tpu.core_type = #tpu.core_type<tc>, window_params = [{transform_indices = @transform_0, window_bounds = array<i64: 16, 128>}, {transform_indices = @transform_1, window_bounds = array<i64: 2, 16, 128>}, {transform_indices = @transform_2, window_bounds = array<i64: 4, 16, 128>}, {transform_indices = @transform_3, window_bounds = array<i64: 4, 16, 128>}, {transform_indices = @transform_4, window_bounds = array<i64: 1, 4, 8, 128>}]} {
    %c0 = arith.constant 0 : index
    %c0_0 = arith.constant 0 : index
    %c0_1 = arith.constant 0 : index
    %0 = vector.load %arg2[%c0, %c0_0, %c0_1] : memref<2x16x128xbf16, #tpu.memory_space<vmem>>, vector<1x16x128xbf16>
    %1 = vector.shape_cast %0 : vector<1x16x128xbf16> to vector<16x128xbf16>
    %2 = arith.extf %1 : vector<16x128xbf16> to vector<16x128xf32>
    %c1 = arith.constant 1 : index
    %c0_2 = arith.constant 0 : index
    %c0_3 = arith.constant 0 : index
    %3 = vector.load %arg2[%c1, %c0_2, %c0_3] : memref<2x16x128xbf16, #tpu.memory_space<vmem>>, vector<1x16x128xbf16>
    %4 = vector.shape_cast %3 : vector<1x16x128xbf16> to vector<16x128xbf16>
    %5 = arith.extf %4 : vector<16x128xbf16> to vector<16x128xf32>
    %cst = arith.constant 0.000000e+00 : f32
    %6 = vector.broadcast %cst : f32 to vector<16x128xf32>
    %7 = arith.cmpf ogt, %2, %6 : vector<16x128xf32>
    %8 = arith.extui %7 : vector<16x128xi1> to vector<16x128xi32>
    %9 = arith.sitofp %8 : vector<16x128xi32> to vector<16x128xf32>
    %c0_4 = arith.constant 0 : index
    %c0_5 = arith.constant 0 : index
    %10 = vector.load %arg1[%c0_4, %c0_5] : memref<16x128xf32, #tpu.memory_space<vmem>>, vector<16x128xf32>
    %11 = math.log %10 : vector<16x128xf32>
    %cst_6 = arith.constant -1.000000e+02 : f32
    %12 = vector.broadcast %cst_6 : f32 to vector<16x128xf32>
    %13 = arith.maximumf %11, %12 : vector<16x128xf32>
    %cst_7 = arith.constant 1.000000e+00 : f32
    %14 = vector.broadcast %cst_7 : f32 to vector<16x128xf32>
    %15 = arith.subf %14, %10 : vector<16x128xf32>
    %16 = math.log %15 : vector<16x128xf32>
    %cst_8 = arith.constant -1.000000e+02 : f32
    %17 = vector.broadcast %cst_8 : f32 to vector<16x128xf32>
    %18 = arith.maximumf %16, %17 : vector<16x128xf32>
    %19 = arith.mulf %2, %13 : vector<16x128xf32>
    %cst_9 = arith.constant 1.000000e+00 : f32
    %20 = vector.broadcast %cst_9 : f32 to vector<16x128xf32>
    %21 = arith.subf %20, %2 : vector<16x128xf32>
    %22 = arith.mulf %21, %18 : vector<16x128xf32>
    %23 = arith.addf %19, %22 : vector<16x128xf32>
    %cst_10 = arith.constant 0.000000e+00 : f32
    %24 = vector.broadcast %cst_10 : f32 to vector<16x128xf32>
    %25 = arith.subf %24, %23 : vector<16x128xf32>
    %26 = vector.shape_cast %25 : vector<16x128xf32> to vector<2x8x128xf32>
    %cst_11 = arith.constant dense<0.000000e+00> : vector<8x128xf32>
    %27 = vector.multi_reduction <add>, %26, %cst_11 [0] : vector<2x8x128xf32> to vector<8x128xf32>
    %c0_12 = arith.constant 0 : index
    %c0_13 = arith.constant 0 : index
    %c0_14 = arith.constant 0 : index
    %c0_15 = arith.constant 0 : index
    %28 = vector.load %arg5[%c0_12, %c0_13, %c0_14, %c0_15] : memref<1x4x8x128xf32, #tpu.memory_space<vmem>>, vector<1x1x8x128xf32>
    %29 = vector.shape_cast %28 : vector<1x1x8x128xf32> to vector<8x128xf32>
    %30 = vector.shape_cast %27 : vector<8x128xf32> to vector<1x1x8x128xf32>
    tpu.vector_store %arg5[%c0_12, %c0_13, %c0_14, %c0_15], %30 {strides = array<i32>} : memref<1x4x8x128xf32, #tpu.memory_space<vmem>>, vector<1x1x8x128xf32>,
    %31 = vector.shape_cast %9 : vector<16x128xf32> to vector<2x8x128xf32>
    %cst_16 = arith.constant dense<0.000000e+00> : vector<8x128xf32>
    %32 = vector.multi_reduction <add>, %31, %cst_16 [0] : vector<2x8x128xf32> to vector<8x128xf32>
    %c0_17 = arith.constant 0 : index
    %c1_18 = arith.constant 1 : index
    %c0_19 = arith.constant 0 : index
    %c0_20 = arith.constant 0 : index
    %33 = vector.load %arg5[%c0_17, %c1_18, %c0_19, %c0_20] : memref<1x4x8x128xf32, #tpu.memory_space<vmem>>, vector<1x1x8x128xf32>
    %34 = vector.shape_cast %33 : vector<1x1x8x128xf32> to vector<8x128xf32>
    %35 = vector.shape_cast %32 : vector<8x128xf32> to vector<1x1x8x128xf32>
    tpu.vector_store %arg5[%c0_17, %c1_18, %c0_19, %c0_20], %35 {strides = array<i32>} : memref<1x4x8x128xf32, #tpu.memory_space<vmem>>, vector<1x1x8x128xf32>,
    %c0_21 = arith.constant 0 : index
    %c0_22 = arith.constant 0 : index
    %c0_23 = arith.constant 0 : index
    %36 = vector.load %arg3[%c0_21, %c0_22, %c0_23] : memref<4x16x128xf32, #tpu.memory_space<vmem>>, vector<1x16x128xf32>
    %37 = vector.shape_cast %36 : vector<1x16x128xf32> to vector<16x128xf32>
    %c1_24 = arith.constant 1 : index
    %c0_25 = arith.constant 0 : index
    %c0_26 = arith.constant 0 : index
    %38 = vector.load %arg3[%c1_24, %c0_25, %c0_26] : memref<4x16x128xf32, #tpu.memory_space<vmem>>, vector<1x16x128xf32>
    %39 = vector.shape_cast %38 : vector<1x16x128xf32> to vector<16x128xf32>
    %40 = arith.maximumf %37, %39 : vector<16x128xf32>
    %c2 = arith.constant 2 : index
    %c0_27 = arith.constant 0 : index
    %c0_28 = arith.constant 0 : index
    %41 = vector.load %arg3[%c2, %c0_27, %c0_28] : memref<4x16x128xf32, #tpu.memory_space<vmem>>, vector<1x16x128xf32>
    %42 = vector.shape_cast %41 : vector<1x16x128xf32> to vector<16x128xf32>
    %43 = arith.maximumf %40, %42 : vector<16x128xf32>
    %c3 = arith.constant 3 : index
    %c0_29 = arith.constant 0 : index
    %c0_30 = arith.constant 0 : index
    %44 = vector.load %arg3[%c3, %c0_29, %c0_30] : memref<4x16x128xf32, #tpu.memory_space<vmem>>, vector<1x16x128xf32>
    %45 = vector.shape_cast %44 : vector<1x16x128xf32> to vector<16x128xf32>
    %46 = arith.maximumf %43, %45 : vector<16x128xf32>
    %cst_31 = arith.constant 0.000000e+00 : f32
    %47 = vector.broadcast %cst_31 : f32 to vector<16x128xf32>
    %cst_32 = arith.constant 0.000000e+00 : f32
    %48 = vector.broadcast %cst_32 : f32 to vector<16x128xf32>
    %c0_33 = arith.constant 0 : index
    %c0_34 = arith.constant 0 : index
    %c0_35 = arith.constant 0 : index
    %49 = vector.load %arg3[%c0_33, %c0_34, %c0_35] : memref<4x16x128xf32, #tpu.memory_space<vmem>>, vector<1x16x128xf32>
    %50 = vector.shape_cast %49 : vector<1x16x128xf32> to vector<16x128xf32>
    %51 = arith.subf %50, %46 : vector<16x128xf32>
    %52 = math.exp %51 : vector<16x128xf32>
    %53 = arith.addf %47, %52 : vector<16x128xf32>
    %cst_36 = arith.constant 0.000000e+00 : f32
    %54 = vector.broadcast %cst_36 : f32 to vector<16x128xf32>
    %55 = arith.cmpf oeq, %5, %54 : vector<16x128xf32>
    %cst_37 = arith.constant 0.000000e+00 : f32
    %56 = vector.broadcast %cst_37 : f32 to vector<16x128xf32>
    %57 = arith.select %55, %50, %56 : vector<16x128xi1>, vector<16x128xf32>
    %58 = arith.addf %48, %57 : vector<16x128xf32>
    %c1_38 = arith.constant 1 : index
    %c0_39 = arith.constant 0 : index
    %c0_40 = arith.constant 0 : index
    %59 = vector.load %arg3[%c1_38, %c0_39, %c0_40] : memref<4x16x128xf32, #tpu.memory_space<vmem>>, vector<1x16x128xf32>
    %60 = vector.shape_cast %59 : vector<1x16x128xf32> to vector<16x128xf32>
    %61 = arith.subf %60, %46 : vector<16x128xf32>
    %62 = math.exp %61 : vector<16x128xf32>
    %63 = arith.addf %53, %62 : vector<16x128xf32>
    %cst_41 = arith.constant 1.000000e+00 : f32
    %64 = vector.broadcast %cst_41 : f32 to vector<16x128xf32>
    %65 = arith.cmpf oeq, %5, %64 : vector<16x128xf32>
    %cst_42 = arith.constant 0.000000e+00 : f32
    %66 = vector.broadcast %cst_42 : f32 to vector<16x128xf32>
    %67 = arith.select %65, %60, %66 : vector<16x128xi1>, vector<16x128xf32>
    %68 = arith.addf %58, %67 : vector<16x128xf32>
    %c2_43 = arith.constant 2 : index
    %c0_44 = arith.constant 0 : index
    %c0_45 = arith.constant 0 : index
    %69 = vector.load %arg3[%c2_43, %c0_44, %c0_45] : memref<4x16x128xf32, #tpu.memory_space<vmem>>, vector<1x16x128xf32>
    %70 = vector.shape_cast %69 : vector<1x16x128xf32> to vector<16x128xf32>
    %71 = arith.subf %70, %46 : vector<16x128xf32>
    %72 = math.exp %71 : vector<16x128xf32>
    %73 = arith.addf %63, %72 : vector<16x128xf32>
    %cst_46 = arith.constant 2.000000e+00 : f32
    %74 = vector.broadcast %cst_46 : f32 to vector<16x128xf32>
    %75 = arith.cmpf oeq, %5, %74 : vector<16x128xf32>
    %cst_47 = arith.constant 0.000000e+00 : f32
    %76 = vector.broadcast %cst_47 : f32 to vector<16x128xf32>
    %77 = arith.select %75, %70, %76 : vector<16x128xi1>, vector<16x128xf32>
    %78 = arith.addf %68, %77 : vector<16x128xf32>
    %c3_48 = arith.constant 3 : index
    %c0_49 = arith.constant 0 : index
    %c0_50 = arith.constant 0 : index
    %79 = vector.load %arg3[%c3_48, %c0_49, %c0_50] : memref<4x16x128xf32, #tpu.memory_space<vmem>>, vector<1x16x128xf32>
    %80 = vector.shape_cast %79 : vector<1x16x128xf32> to vector<16x128xf32>
    %81 = arith.subf %80, %46 : vector<16x128xf32>
    %82 = math.exp %81 : vector<16x128xf32>
    %83 = arith.addf %73, %82 : vector<16x128xf32>
    %cst_51 = arith.constant 3.000000e+00 : f32
    %84 = vector.broadcast %cst_51 : f32 to vector<16x128xf32>
    %85 = arith.cmpf oeq, %5, %84 : vector<16x128xf32>
    %cst_52 = arith.constant 0.000000e+00 : f32
    %86 = vector.broadcast %cst_52 : f32 to vector<16x128xf32>
    %87 = arith.select %85, %80, %86 : vector<16x128xi1>, vector<16x128xf32>
    %88 = arith.addf %78, %87 : vector<16x128xf32>
    %89 = math.log %83 : vector<16x128xf32>
    %90 = arith.addf %46, %89 : vector<16x128xf32>
    %91 = arith.subf %90, %88 : vector<16x128xf32>
    %92 = arith.mulf %91, %9 : vector<16x128xf32>
    %93 = vector.shape_cast %92 : vector<16x128xf32> to vector<2x8x128xf32>
    %cst_53 = arith.constant dense<0.000000e+00> : vector<8x128xf32>
    %94 = vector.multi_reduction <add>, %93, %cst_53 [0] : vector<2x8x128xf32> to vector<8x128xf32>
    %c0_54 = arith.constant 0 : index
    %c2_55 = arith.constant 2 : index
    %c0_56 = arith.constant 0 : index
    %c0_57 = arith.constant 0 : index
    %95 = vector.load %arg5[%c0_54, %c2_55, %c0_56, %c0_57] : memref<1x4x8x128xf32, #tpu.memory_space<vmem>>, vector<1x1x8x128xf32>
    %96 = vector.shape_cast %95 : vector<1x1x8x128xf32> to vector<8x128xf32>
    %97 = vector.shape_cast %94 : vector<8x128xf32> to vector<1x1x8x128xf32>
    tpu.vector_store %arg5[%c0_54, %c2_55, %c0_56, %c0_57], %97 {strides = array<i32>} : memref<1x4x8x128xf32, #tpu.memory_space<vmem>>, vector<1x1x8x128xf32>,
    %c0_58 = arith.constant 0 : index
    %c0_59 = arith.constant 0 : index
    %c0_60 = arith.constant 0 : index
    %98 = vector.load %arg4[%c0_58, %c0_59, %c0_60] : memref<4x16x128xf32, #tpu.memory_space<vmem>>, vector<1x16x128xf32>
    %99 = vector.shape_cast %98 : vector<1x16x128xf32> to vector<16x128xf32>
    %c1_61 = arith.constant 1 : index
    %c0_62 = arith.constant 0 : index
    %c0_63 = arith.constant 0 : index
    %100 = vector.load %arg4[%c1_61, %c0_62, %c0_63] : memref<4x16x128xf32, #tpu.memory_space<vmem>>, vector<1x16x128xf32>
    %101 = vector.shape_cast %100 : vector<1x16x128xf32> to vector<16x128xf32>
    %102 = arith.maximumf %99, %101 : vector<16x128xf32>
    %c2_64 = arith.constant 2 : index
    %c0_65 = arith.constant 0 : index
    %c0_66 = arith.constant 0 : index
    %103 = vector.load %arg4[%c2_64, %c0_65, %c0_66] : memref<4x16x128xf32, #tpu.memory_space<vmem>>, vector<1x16x128xf32>
    %104 = vector.shape_cast %103 : vector<1x16x128xf32> to vector<16x128xf32>
    %105 = arith.maximumf %102, %104 : vector<16x128xf32>
    %c3_67 = arith.constant 3 : index
    %c0_68 = arith.constant 0 : index
    %c0_69 = arith.constant 0 : index
    %106 = vector.load %arg4[%c3_67, %c0_68, %c0_69] : memref<4x16x128xf32, #tpu.memory_space<vmem>>, vector<1x16x128xf32>
    %107 = vector.shape_cast %106 : vector<1x16x128xf32> to vector<16x128xf32>
    %108 = arith.maximumf %105, %107 : vector<16x128xf32>
    %cst_70 = arith.constant 0.000000e+00 : f32
    %109 = vector.broadcast %cst_70 : f32 to vector<16x128xf32>
    %cst_71 = arith.constant 0.000000e+00 : f32
    %110 = vector.broadcast %cst_71 : f32 to vector<16x128xf32>
    %c0_72 = arith.constant 0 : index
    %c0_73 = arith.constant 0 : index
    %c0_74 = arith.constant 0 : index
    %111 = vector.load %arg4[%c0_72, %c0_73, %c0_74] : memref<4x16x128xf32, #tpu.memory_space<vmem>>, vector<1x16x128xf32>
    %112 = vector.shape_cast %111 : vector<1x16x128xf32> to vector<16x128xf32>
    %113 = arith.subf %112, %108 : vector<16x128xf32>
    %114 = math.exp %113 : vector<16x128xf32>
    %115 = arith.addf %109, %114 : vector<16x128xf32>
    %cst_75 = arith.constant 0.000000e+00 : f32
    %116 = vector.broadcast %cst_75 : f32 to vector<16x128xf32>
    %117 = arith.cmpf oeq, %5, %116 : vector<16x128xf32>
    %cst_76 = arith.constant 0.000000e+00 : f32
    %118 = vector.broadcast %cst_76 : f32 to vector<16x128xf32>
    %119 = arith.select %117, %112, %118 : vector<16x128xi1>, vector<16x128xf32>
    %120 = arith.addf %110, %119 : vector<16x128xf32>
    %c1_77 = arith.constant 1 : index
    %c0_78 = arith.constant 0 : index
    %c0_79 = arith.constant 0 : index
    %121 = vector.load %arg4[%c1_77, %c0_78, %c0_79] : memref<4x16x128xf32, #tpu.memory_space<vmem>>, vector<1x16x128xf32>
    %122 = vector.shape_cast %121 : vector<1x16x128xf32> to vector<16x128xf32>
    %123 = arith.subf %122, %108 : vector<16x128xf32>
    %124 = math.exp %123 : vector<16x128xf32>
    %125 = arith.addf %115, %124 : vector<16x128xf32>
    %cst_80 = arith.constant 1.000000e+00 : f32
    %126 = vector.broadcast %cst_80 : f32 to vector<16x128xf32>
    %127 = arith.cmpf oeq, %5, %126 : vector<16x128xf32>
    %cst_81 = arith.constant 0.000000e+00 : f32
    %128 = vector.broadcast %cst_81 : f32 to vector<16x128xf32>
    %129 = arith.select %127, %122, %128 : vector<16x128xi1>, vector<16x128xf32>
    %130 = arith.addf %120, %129 : vector<16x128xf32>
    %c2_82 = arith.constant 2 : index
    %c0_83 = arith.constant 0 : index
    %c0_84 = arith.constant 0 : index
    %131 = vector.load %arg4[%c2_82, %c0_83, %c0_84] : memref<4x16x128xf32, #tpu.memory_space<vmem>>, vector<1x16x128xf32>
    %132 = vector.shape_cast %131 : vector<1x16x128xf32> to vector<16x128xf32>
    %133 = arith.subf %132, %108 : vector<16x128xf32>
    %134 = math.exp %133 : vector<16x128xf32>
    %135 = arith.addf %125, %134 : vector<16x128xf32>
    %cst_85 = arith.constant 2.000000e+00 : f32
    %136 = vector.broadcast %cst_85 : f32 to vector<16x128xf32>
    %137 = arith.cmpf oeq, %5, %136 : vector<16x128xf32>
    %cst_86 = arith.constant 0.000000e+00 : f32
    %138 = vector.broadcast %cst_86 : f32 to vector<16x128xf32>
    %139 = arith.select %137, %132, %138 : vector<16x128xi1>, vector<16x128xf32>
    %140 = arith.addf %130, %139 : vector<16x128xf32>
    %c3_87 = arith.constant 3 : index
    %c0_88 = arith.constant 0 : index
    %c0_89 = arith.constant 0 : index
    %141 = vector.load %arg4[%c3_87, %c0_88, %c0_89] : memref<4x16x128xf32, #tpu.memory_space<vmem>>, vector<1x16x128xf32>
    %142 = vector.shape_cast %141 : vector<1x16x128xf32> to vector<16x128xf32>
    %143 = arith.subf %142, %108 : vector<16x128xf32>
    %144 = math.exp %143 : vector<16x128xf32>
    %145 = arith.addf %135, %144 : vector<16x128xf32>
    %cst_90 = arith.constant 3.000000e+00 : f32
    %146 = vector.broadcast %cst_90 : f32 to vector<16x128xf32>
    %147 = arith.cmpf oeq, %5, %146 : vector<16x128xf32>
    %cst_91 = arith.constant 0.000000e+00 : f32
    %148 = vector.broadcast %cst_91 : f32 to vector<16x128xf32>
    %149 = arith.select %147, %142, %148 : vector<16x128xi1>, vector<16x128xf32>
    %150 = arith.addf %140, %149 : vector<16x128xf32>
    %151 = math.log %145 : vector<16x128xf32>
    %152 = arith.addf %108, %151 : vector<16x128xf32>
    %153 = arith.subf %152, %150 : vector<16x128xf32>
    %154 = arith.mulf %153, %9 : vector<16x128xf32>
    %155 = vector.shape_cast %154 : vector<16x128xf32> to vector<2x8x128xf32>
    %cst_92 = arith.constant dense<0.000000e+00> : vector<8x128xf32>
    %156 = vector.multi_reduction <add>, %155, %cst_92 [0] : vector<2x8x128xf32> to vector<8x128xf32>
    %c0_93 = arith.constant 0 : index
    %c3_94 = arith.constant 3 : index
    %c0_95 = arith.constant 0 : index
    %c0_96 = arith.constant 0 : index
    %157 = vector.load %arg5[%c0_93, %c3_94, %c0_95, %c0_96] : memref<1x4x8x128xf32, #tpu.memory_space<vmem>>, vector<1x1x8x128xf32>
    %158 = vector.shape_cast %157 : vector<1x1x8x128xf32> to vector<8x128xf32>
    %159 = vector.shape_cast %156 : vector<8x128xf32> to vector<1x1x8x128xf32>
    tpu.vector_store %arg5[%c0_93, %c3_94, %c0_95, %c0_96], %159 {strides = array<i32>} : memref<1x4x8x128xf32, #tpu.memory_space<vmem>>, vector<1x1x8x128xf32>,
    return
  }
  func.func @transform_0(%arg0: i32) -> (i32, i32) {
    %c0_i32 = arith.constant 0 : i32
    %c0_i32_0 = arith.constant 0 : i32
    return %arg0, %c0_i32 : i32, i32
  }
  func.func @transform_1(%arg0: i32) -> (i32, i32, i32) {
    %c0_i32 = arith.constant 0 : i32
    %c0_i32_0 = arith.constant 0 : i32
    %c0_i32_1 = arith.constant 0 : i32
    return %c0_i32, %arg0, %c0_i32_0 : i32, i32, i32
  }
  func.func @transform_2(%arg0: i32) -> (i32, i32, i32) {
    %c0_i32 = arith.constant 0 : i32
    %c0_i32_0 = arith.constant 0 : i32
    %c0_i32_1 = arith.constant 0 : i32
    return %c0_i32, %arg0, %c0_i32_0 : i32, i32, i32
  }
  func.func @transform_3(%arg0: i32) -> (i32, i32, i32) {
    %c0_i32 = arith.constant 0 : i32
    %c0_i32_0 = arith.constant 0 : i32
    %c0_i32_1 = arith.constant 0 : i32
    return %c0_i32, %arg0, %c0_i32_0 : i32, i32, i32
  }
  func.func @transform_4(%arg0: i32) -> (i32, i32, i32, i32) {
    %c0_i32 = arith.constant 0 : i32
    %c0_i32_0 = arith.constant 0 : i32
    %c0_i32_1 = arith.constant 0 : i32
    %c0_i32_2 = arith.constant 0 : i32
    return %arg0, %c0_i32, %c0_i32_0, %c0_i32_1 : i32, i32, i32, i32
  }
}

</mosaic_0001>

<llo_original>
// kernel: tpu_custom_call.1
$region0: #{tpu_custom_call.1}
  #allocation0 [shape = 'u32[]', space=smem, size = 0x4, offset = 0x4, fixed_abs, tag = 'smem constant byte address 0x4 - core index']
  #allocation1 [shape = 'u32[144,128]{1,0:T(1,128)}', space=vmem, size = 0x12000, scoped, tag = 'internal scratch']
  %s0 = inlined_call_operand.hbm [shape: f32[16,128], index: 0, kind: input, shape index: {}]
  %s1 = inlined_call_operand.hbm [shape: bf16[2,16,128], index: 1, kind: input, shape index: {}]
  %s2 = inlined_call_operand.hbm [shape: f32[4,16,128], index: 2, kind: input, shape index: {}]
  %s3 = inlined_call_operand.hbm [shape: f32[4,16,128], index: 3, kind: input, shape index: {}]
  %s4 = inlined_call_operand.hbm [shape: f32[1,4,8,128], index: 4, kind: output, shape index: {}]
  %s5 = sld [smem:[#allocation0]]
  $region42: #{tpu_custom_call.1} parent=0
    _
  %s7 = ssub.s32 1, %s5
  %s8 = scalar_select 0, %s7, %s5
  $region1: #{tpu_custom_call.1} parent=0
    #allocation2 [shape = 'u8[8192]{0}', space=vmem, size = 0x2000, scoped, tag = 'input window, operand 0, single buffered']
    #allocation3 [shape = 's32[1]{0}', space=sflag, size = 0x4, scoped, tag = 'scoped memory for tpu_custom_call.1']
    #allocation4 [shape = 's32[1]{0}', space=sflag, size = 0x4, scoped, tag = 'scoped memory for tpu_custom_call.1']
    #allocation5 [shape = 'u8[8192]{0}', space=vmem, size = 0x2000, scoped, tag = 'input window, operand 1, single buffered']
    #allocation6 [shape = 's32[1]{0}', space=sflag, size = 0x4, scoped, tag = 'scoped memory for tpu_custom_call.1']
    #allocation7 [shape = 'u8[32768]{0}', space=vmem, size = 0x8000, scoped, tag = 'input window, operand 2, single buffered']
    #allocation8 [shape = 'u8[32768]{0}', space=vmem, size = 0x8000, scoped, tag = 'input window, operand 3, single buffered']
    #allocation9 [shape = 's32[1]{0}', space=sflag, size = 0x4, scoped, tag = 'scoped memory for tpu_custom_call.1']
    #allocation10 [shape = 'u8[16384]{0}', space=vmem, size = 0x4000, scoped, tag = 'output window, operand 0, single buffered']
    %9 = vsyncpa [#allocation3], 0
    %10 = vsyncpa [#allocation6], 0
    %11 = vsyncpa [#allocation9], 0
    %12 = vsyncpa [#allocation4], 0
    // Predicated region
    $region2: #{tpu_custom_call.1} parent=1 // pred_check
      _
    $region3: #{tpu_custom_call.1} parent=1 // pred_check_branch
      %14 = sbr.rel (0) target = $region5
    $region4: #{tpu_custom_call.1} parent=1 // pred_region
      %s16 = ssub.s32 256, 256
      %17 = vsyncadd [#allocation3], %s16
      %s18 = sshll.u32 [#allocation2], 4
      %s19 = int_to_ptr.vmem [resolvable:$true] %s18
      %24 = dma.hbm_to_vmem [thread:$0]  %s0, 256, %s19, [#allocation3], 128, 128, 8
    $region5: #{tpu_custom_call.1} parent=1 // pred_fallthru
      _
    // Predicated region
    $region6: #{tpu_custom_call.1} parent=1 // pred_check
      _
    $region7: #{tpu_custom_call.1} parent=1 // pred_check_branch
      %26 = sbr.rel (0) target = $region9
    $region8: #{tpu_custom_call.1} parent=1 // pred_region
      %s28 = ssub.s32 256, 256
      %29 = vsyncadd [#allocation6], %s28
      %s30 = sshll.u32 [#allocation5], 4
      %s31 = int_to_ptr.vmem [resolvable:$true] %s30
      %36 = dma.hbm_to_vmem [thread:$0]  %s1, 256, %s31, [#allocation6], 64, 64, 4
    $region9: #{tpu_custom_call.1} parent=1 // pred_fallthru
      _
    // Predicated region
    $region10: #{tpu_custom_call.1} parent=1 // pred_check
      _
    $region11: #{tpu_custom_call.1} parent=1 // pred_check_branch
      %38 = sbr.rel (0) target = $region13
    $region12: #{tpu_custom_call.1} parent=1 // pred_region
      %s40 = ssub.s32 1024, 1024
      %41 = vsyncadd [#allocation6], %s40
      %s42 = sshll.u32 [#allocation7], 4
      %s43 = int_to_ptr.vmem [resolvable:$true] %s42
      %48 = dma.hbm_to_vmem [thread:$0]  %s2, 1024, %s43, [#allocation6], 128, 128, 8
    $region13: #{tpu_custom_call.1} parent=1 // pred_fallthru
      _
    // Predicated region
    $region14: #{tpu_custom_call.1} parent=1 // pred_check
      _
    $region15: #{tpu_custom_call.1} parent=1 // pred_check_branch
      %50 = sbr.rel (0) target = $region17
    $region16: #{tpu_custom_call.1} parent=1 // pred_region
      %s52 = ssub.s32 1024, 1024
      %53 = vsyncadd [#allocation9], %s52
      %s54 = sshll.u32 [#allocation8], 4
      %s55 = int_to_ptr.vmem [resolvable:$true] %s54
      %60 = dma.hbm_to_vmem [thread:$0]  %s3, 1024, %s55, [#allocation9], 128, 128, 8
    $region17: #{tpu_custom_call.1} parent=1 // pred_fallthru
      _
    // Predicated region
    $region18: #{tpu_custom_call.1} parent=1 // pred_check
      _
    $region19: #{tpu_custom_call.1} parent=1 // pred_check_branch
      %62 = sbr.rel (0) target = $region21
    $region20: #{tpu_custom_call.1} parent=1 // pred_region
      %63 = dma.done [#allocation3], 256
    $region21: #{tpu_custom_call.1} parent=1 // pred_fallthru
      _
    // Predicated region
    $region22: #{tpu_custom_call.1} parent=1 // pred_check
      _
    $region23: #{tpu_custom_call.1} parent=1 // pred_check_branch
      %65 = sbr.rel (0) target = $region25
    $region24: #{tpu_custom_call.1} parent=1 // pred_region
      %66 = dma.done [#allocation6], 256
    $region25: #{tpu_custom_call.1} parent=1 // pred_fallthru
      _
    // Predicated region
    $region26: #{tpu_custom_call.1} parent=1 // pred_check
      _
    $region27: #{tpu_custom_call.1} parent=1 // pred_check_branch
      %68 = sbr.rel (0) target = $region29
    $region28: #{tpu_custom_call.1} parent=1 // pred_region
      %69 = dma.done [#allocation6], 1024
    $region29: #{tpu_custom_call.1} parent=1 // pred_fallthru
      _
    // Predicated region
    $region30: #{tpu_custom_call.1} parent=1 // pred_check
      _
    $region31: #{tpu_custom_call.1} parent=1 // pred_check_branch
      %71 = sbr.rel (0) target = $region33
    $region32: #{tpu_custom_call.1} parent=1 // pred_region
      %72 = dma.done [#allocation9], 1024
    $region33: #{tpu_custom_call.1} parent=1 // pred_fallthru
      _
    %v73 = vld [vmem:[#allocation5] sm:$0xf]
    %v74 = vld [vmem:[#allocation5 + $0x4] sm:$0xf]
    %v75 = vunpack.c.l.bf16 %v73
    %v76 = vunpack.c.l.bf16 %v74
    %s77 = scalar_lea.vmem [#allocation5], 8
    %v78 = vld [vmem:[%s77] sm:$0xf]
    %v79 = vld [vmem:[%s77 + $0x4] sm:$0xf]
    %v80 = vunpack.c.l.bf16 %v78
    %v81 = vunpack.c.l.bf16 %v79
    %vm82 = vcmp.gt.f32.partialorder %v75, 0.0
    %vm83 = vcmp.gt.f32.partialorder %v76, 0.0
    %v84 = vsel %vm82, 1, 0
    %v85 = vsel %vm83, 1, 0
    %v86 = vcvt.s32.f32 %v84
    %v87 = vcvt.s32.f32 %v85
    %v88 = vld [vmem:[#allocation2] sm:$0xff]
    %v89 = vld [vmem:[#allocation2 + $0x8] sm:$0xff]
    %v90 = vlog2.pop %v88
    %v91 = vmul.f32 %v90, 0.6931472
    %v92 = vlog2.pop %v89
    %v93 = vmul.f32 %v92, 0.6931472
    %v94 = vmax.f32 %v91, -100.0
    %v95 = vmax.f32 %v93, -100.0
    %v96 = vsub.f32 1.0, %v88
    %v97 = vsub.f32 1.0, %v89
    %v98 = vlog2.pop %v96
    %v99 = vmul.f32 %v98, 0.6931472
    %v100 = vlog2.pop %v97
    %v101 = vmul.f32 %v100, 0.6931472
    %v102 = vmax.f32 %v99, -100.0
    %v103 = vmax.f32 %v101, -100.0
    %v104 = vmul.f32 %v75, %v94
    %v105 = vmul.f32 %v76, %v95
    %v106 = vsub.f32 1.0, %v75
    %v107 = vsub.f32 1.0, %v76
    %v108 = vmul.f32 %v106, %v102
    %v109 = vmul.f32 %v107, %v103
    %v110 = vadd.f32 %v104, %v108
    %v111 = vadd.f32 %v105, %v109
    %v112 = vsub.f32 0.0, %v110
    %v113 = vsub.f32 0.0, %v111
    %v114 = vadd.f32 %v112, %v113
    %115 = vst [vmem:[#allocation10] sm:$0xff] %v114
    %v116 = vadd.f32 %v86, %v87
    %s117 = scalar_lea.vmem [#allocation10], 8
    %118 = vst [vmem:[%s117] sm:$0xff] %v116
    %v119 = vld [vmem:[#allocation7] sm:$0xff]
    %v120 = vld [vmem:[#allocation7 + $0x8] sm:$0xff]
    %s121 = scalar_lea.vmem [#allocation7], 16
    %v122 = vld [vmem:[%s121] sm:$0xff]
    %v123 = vld [vmem:[%s121 + $0x8] sm:$0xff]
    %v124 = vmax.f32 %v119, %v122
    %v125 = vmax.f32 %v120, %v123
    %s126 = scalar_lea.vmem [#allocation7], 32
    %v127 = vld [vmem:[%s126] sm:$0xff]
    %v128 = vld [vmem:[%s126 + $0x8] sm:$0xff]
    %v129 = vmax.f32 %v124, %v127
    %v130 = vmax.f32 %v125, %v128
    %s131 = scalar_lea.vmem [#allocation7], 48
    %v132 = vld [vmem:[%s131] sm:$0xff]
    %v133 = vld [vmem:[%s131 + $0x8] sm:$0xff]
    %v134 = vmax.f32 %v129, %v132
    %v135 = vmax.f32 %v130, %v133
    %v136 = vsub.f32 %v119, %v134
    %v137 = vsub.f32 %v120, %v135
    %v138 = vmul.f32 %v136, 1.442695
    %v139 = vpow.pop %v138
    %v140 = vmul.f32 %v137, 1.442695
    %v141 = vpow.pop %v140
    %v142 = vadd.f32 %v139, 0.0
    %v143 = vadd.f32 %v141, 0.0
    %vm144 = vcmp.eq.f32.partialorder %v80, 0.0
    %vm145 = vcmp.eq.f32.partialorder %v81, 0.0
    %v146 = vsel %vm144, %v119, 0.0
    %v147 = vsel %vm145, %v120, 0.0
    %v148 = vadd.f32 %v146, 0.0
    %v149 = vadd.f32 %v147, 0.0
    %v150 = vsub.f32 %v122, %v134
    %v151 = vsub.f32 %v123, %v135
    %v152 = vmul.f32 %v150, 1.442695
    %v153 = vpow.pop %v152
    %v154 = vmul.f32 %v151, 1.442695
    %v155 = vpow.pop %v154
    %v156 = vadd.f32 %v142, %v153
    %v157 = vadd.f32 %v143, %v155
    %vm158 = vcmp.eq.f32.partialorder %v80, 1.0
    %vm159 = vcmp.eq.f32.partialorder %v81, 1.0
    %v160 = vsel %vm158, %v122, 0.0
    %v161 = vsel %vm159, %v123, 0.0
    %v162 = vadd.f32 %v148, %v160
    %v163 = vadd.f32 %v149, %v161
    %v164 = vsub.f32 %v127, %v134
    %v165 = vsub.f32 %v128, %v135
    %v166 = vmul.f32 %v164, 1.442695
    %v167 = vpow.pop %v166
    %v168 = vmul.f32 %v165, 1.442695
    %v169 = vpow.pop %v168
    %v170 = vadd.f32 %v156, %v167
    %v171 = vadd.f32 %v157, %v169
    %vm172 = vcmp.eq.f32.partialorder %v80, 2.0
    %vm173 = vcmp.eq.f32.partialorder %v81, 2.0
    %v174 = vsel %vm172, %v127, 0.0
    %v175 = vsel %vm173, %v128, 0.0
    %v176 = vadd.f32 %v162, %v174
    %v177 = vadd.f32 %v163, %v175
    %v178 = vsub.f32 %v132, %v134
    %v179 = vsub.f32 %v133, %v135
    %v180 = vmul.f32 %v178, 1.442695
    %v181 = vpow.pop %v180
    %v182 = vmul.f32 %v179, 1.442695
    %v183 = vpow.pop %v182
    %v184 = vadd.f32 %v170, %v181
    %v185 = vadd.f32 %v171, %v183
    %vm186 = vcmp.eq.f32.partialorder %v80, 3.0
    %vm187 = vcmp.eq.f32.partialorder %v81, 3.0
    %v188 = vsel %vm186, %v132, 0.0
    %v189 = vsel %vm187, %v133, 0.0
    %v190 = vadd.f32 %v176, %v188
    %v191 = vadd.f32 %v177, %v189
    %v192 = vlog2.pop %v184
    %v193 = vmul.f32 %v192, 0.6931472
    %v194 = vlog2.pop %v185
    %v195 = vmul.f32 %v194, 0.6931472
    %v196 = vadd.f32 %v134, %v193
    %v197 = vadd.f32 %v135, %v195
    %v198 = vsub.f32 %v196, %v190
    %v199 = vsub.f32 %v197, %v191
    %v200 = vmul.f32 %v198, %v86
    %v201 = vmul.f32 %v199, %v87
    %v202 = vadd.f32 %v200, %v201
    %s203 = scalar_lea.vmem [#allocation10], 16
    %204 = vst [vmem:[%s203] sm:$0xff] %v202
    %v205 = vld [vmem:[#allocation8] sm:$0xff]
    %v206 = vld [vmem:[#allocation8 + $0x8] sm:$0xff]
    %s207 = scalar_lea.vmem [#allocation8], 16
    %v208 = vld [vmem:[%s207] sm:$0xff]
    %v209 = vld [vmem:[%s207 + $0x8] sm:$0xff]
    %v210 = vmax.f32 %v205, %v208
    %v211 = vmax.f32 %v206, %v209
    %s212 = scalar_lea.vmem [#allocation8], 32
    %v213 = vld [vmem:[%s212] sm:$0xff]
    %v214 = vld [vmem:[%s212 + $0x8] sm:$0xff]
    %v215 = vmax.f32 %v210, %v213
    %v216 = vmax.f32 %v211, %v214
    %s217 = scalar_lea.vmem [#allocation8], 48
    %v218 = vld [vmem:[%s217] sm:$0xff]
    %v219 = vld [vmem:[%s217 + $0x8] sm:$0xff]
    %v220 = vmax.f32 %v215, %v218
    %v221 = vmax.f32 %v216, %v219
    %v222 = vsub.f32 %v205, %v220
    %v223 = vsub.f32 %v206, %v221
    %v224 = vmul.f32 %v222, 1.442695
    %v225 = vpow.pop %v224
    %v226 = vmul.f32 %v223, 1.442695
    %v227 = vpow.pop %v226
    %v228 = vadd.f32 %v225, 0.0
    %v229 = vadd.f32 %v227, 0.0
    %v230 = vsel %vm144, %v205, 0.0
    %v231 = vsel %vm145, %v206, 0.0
    %v232 = vadd.f32 %v230, 0.0
    %v233 = vadd.f32 %v231, 0.0
    %v234 = vsub.f32 %v208, %v220
    %v235 = vsub.f32 %v209, %v221
    %v236 = vmul.f32 %v234, 1.442695
    %v237 = vpow.pop %v236
    %v238 = vmul.f32 %v235, 1.442695
    %v239 = vpow.pop %v238
    %v240 = vadd.f32 %v228, %v237
    %v241 = vadd.f32 %v229, %v239
    %v242 = vsel %vm158, %v208, 0.0
    %v243 = vsel %vm159, %v209, 0.0
    %v244 = vadd.f32 %v232, %v242
    %v245 = vadd.f32 %v233, %v243
    %v246 = vsub.f32 %v213, %v220
    %v247 = vsub.f32 %v214, %v221
    %v248 = vmul.f32 %v246, 1.442695
    %v249 = vpow.pop %v248
    %v250 = vmul.f32 %v247, 1.442695
    %v251 = vpow.pop %v250
    %v252 = vadd.f32 %v240, %v249
    %v253 = vadd.f32 %v241, %v251
    %v254 = vsel %vm172, %v213, 0.0
    %v255 = vsel %vm173, %v214, 0.0
    %v256 = vadd.f32 %v244, %v254
    %v257 = vadd.f32 %v245, %v255
    %v258 = vsub.f32 %v218, %v220
    %v259 = vsub.f32 %v219, %v221
    %v260 = vmul.f32 %v258, 1.442695
    %v261 = vpow.pop %v260
    %v262 = vmul.f32 %v259, 1.442695
    %v263 = vpow.pop %v262
    %v264 = vadd.f32 %v252, %v261
    %v265 = vadd.f32 %v253, %v263
    %v266 = vsel %vm186, %v218, 0.0
    %v267 = vsel %vm187, %v219, 0.0
    %v268 = vadd.f32 %v256, %v266
    %v269 = vadd.f32 %v257, %v267
    %v270 = vlog2.pop %v264
    %v271 = vmul.f32 %v270, 0.6931472
    %v272 = vlog2.pop %v265
    %v273 = vmul.f32 %v272, 0.6931472
    %v274 = vadd.f32 %v220, %v271
    %v275 = vadd.f32 %v221, %v273
    %v276 = vsub.f32 %v274, %v268
    %v277 = vsub.f32 %v275, %v269
    %v278 = vmul.f32 %v276, %v86
    %v279 = vmul.f32 %v277, %v87
    %v280 = vadd.f32 %v278, %v279
    %s281 = scalar_lea.vmem [#allocation10], 24
    %282 = vst [vmem:[%s281] sm:$0xff] %v280
    // Predicated region
    $region34: #{tpu_custom_call.1} parent=1 // pred_check
      _
    $region35: #{tpu_custom_call.1} parent=1 // pred_check_branch
      %284 = sbr.rel (0) target = $region37
    $region36: #{tpu_custom_call.1} parent=1 // pred_region
      %s286 = ssub.s32 512, 512
      %287 = vsyncadd [#allocation4], %s286
      %s288 = sshll.u32 [#allocation10], 4
      %s289 = int_to_ptr.vmem [resolvable:$true] %s288
      %294 = dma.vmem_to_hbm [thread:$0]  %s289, 512, %s4, [#allocation4], 128, 128, 8
    $region37: #{tpu_custom_call.1} parent=1 // pred_fallthru
      _
    // Predicated region
    $region38: #{tpu_custom_call.1} parent=1 // pred_check
      _
    $region39: #{tpu_custom_call.1} parent=1 // pred_check_branch
      %296 = sbr.rel (0) target = $region41
    $region40: #{tpu_custom_call.1} parent=1 // pred_region
      %297 = dma.done [#allocation4], 512
    $region41: #{tpu_custom_call.1} parent=1 // pred_fallthru
      _
    %298 = vsyncpa [#allocation3], 1
    %299 = vsyncpa [#allocation6], 1
    %300 = vsyncpa [#allocation9], 1
    %301 = vsyncpa [#allocation4], 1

</llo_original>
